<compile_context>
chip_gen: v7x
topology: tpu7x:2x2x1
jax: 0.10.0
libtpu: 0.0.40
codegen_flags: <defaults>
</compile_context>

<pallas_src>
import jax
import jax.numpy as jnp
from jax.experimental import pallas as pl
from jax.experimental.pallas import tpu as pltpu

_LANE_CANDIDATES = (1024, 512, 256, 128)   # lane-dense widths (multiples of 128)
_TARGET_TILE_BYTES = 4 * 1024 * 1024       # ~4 MiB per buffer (per review)
_VMEM_LIMIT_BYTES = 32 * 1024 * 1024       # in+out double-buffered ~16 MiB + slack


def _binary_sigmoid_kernel(x_ref, o_ref):
    # round(sigmoid(x)) under round-half-to-even == 1 where x > 0 else 0 for
    # all finite x.  Single VPU compare + cast; no constant broadcast/select.
    o_ref[...] = (x_ref[...] > 0).astype(o_ref.dtype)


def _sublanes_for(dtype) -> int:
    """Native sublane packing for the dtype: 8 (f32) / 16 (bf16) / 32 (int8)."""
    return max(8, 32 // jnp.dtype(dtype).itemsize)


def _pick_lane(n: int, sub: int):
    """Widest lane so n reshapes zero-copy into (rows, lane) with rows % sub == 0.

    Prefers a lane that still leaves >= 2 sublane-groups of rows so the grid
    can be split across both TensorCores (v7x).  Returns None if nothing
    divides (caller falls back to bulk + tail handling).
    """
    divisible = [c for c in _LANE_CANDIDATES if n % (c * sub) == 0]
    if not divisible:
        return None
    splittable = [c for c in divisible if (n // c) >= 2 * sub]
    return splittable[0] if splittable else divisible[0]


def _choose_tile_rows(rows: int, lane: int, sub: int, itemsize: int) -> int:
    """Tile rows: ~4 MiB per buffer, sublane-aligned, >= 2 blocks when possible."""
    target = max(sub, (_TARGET_TILE_BYTES // (lane * itemsize)) // sub * sub)
    if rows > target:
        return target
    if rows > sub:
        # Small array: make at least two grid blocks so the "parallel" axis
        # can be sharded across both TensorCores on v7x.
        return max(sub, (rows // 2) // sub * sub)
    return rows


def _run_2d(flat: jax.Array, total: int, lane: int, sub: int, out_dtype) -> jax.Array:
    """Run the elementwise kernel over a zero-copy (rows, lane) view of `flat`."""
    in_itemsize = jnp.dtype(flat.dtype).itemsize
    out_itemsize = jnp.dtype(out_dtype).itemsize
    rows = total // lane
    tile_rows = _choose_tile_rows(rows, lane, sub, in_itemsize)
    grid = (pl.cdiv(rows, tile_rows),)

    x2d = flat.reshape(rows, lane)

    out2d = pl.pallas_call(
        _binary_sigmoid_kernel,
        out_shape=jax.ShapeDtypeStruct((rows, lane), out_dtype),
        grid=grid,
        in_specs=[pl.BlockSpec((tile_rows, lane), lambda i: (i, 0))],
        out_specs=pl.BlockSpec((tile_rows, lane), lambda i: (i, 0)),
        compiler_params=pltpu.CompilerParams(
            dimension_semantics=("parallel",),
            vmem_limit_bytes=_VMEM_LIMIT_BYTES,
        ),
        cost_estimate=pl.CostEstimate(
            flops=total,
            transcendentals=0,
            bytes_accessed=total * (in_itemsize + out_itemsize),
        ),
        # NOTE: input_output_aliases={0: 0} would drop the extra output
        # allocation, but x is kept live as the VJP residual here, so no alias.
    )(x2d)
    return out2d.reshape(-1)


def _binary_sigmoid_forward_value(x: jax.Array, out_dtype=None) -> jax.Array:
    """Elementwise round(sigmoid(x)) via tiled, lane-dense Pallas kernels.

    `out_dtype` optionally narrows the written mask (values are only {0, 1}),
    cutting output HBM traffic; defaults to x.dtype to mirror the PyTorch op.
    """
    out_dtype = x.dtype if out_dtype is None else jnp.dtype(out_dtype)
    orig_shape = x.shape
    total = x.size
    if total == 0:
        return x.astype(out_dtype)

    sub = _sublanes_for(x.dtype)
    flat = x.reshape(-1)

    lane = _pick_lane(total, sub)
    if lane is not None:
        # Common path: zero-copy reshape, no padding, no tail slice.
        out_flat = _run_2d(flat, total, lane, sub, out_dtype)
    else:
        # Fallback: aligned bulk as a zero-copy view + tiny padded tail call.
        chunk = 128 * sub
        bulk = (total // chunk) * chunk
        pieces = []
        if bulk:
            blane = _pick_lane(bulk, sub)  # always succeeds (128 divides bulk)
            pieces.append(_run_2d(flat[:bulk], bulk, blane, sub, out_dtype))
        rem = total - bulk
        if rem:
            tail = jnp.pad(flat[bulk:], (0, chunk - rem))
            pieces.append(_run_2d(tail, chunk, 128, sub, out_dtype)[:rem])
        out_flat = pieces[0] if len(pieces) == 1 else jnp.concatenate(pieces)

    return out_flat.reshape(orig_shape)


@jax.custom_vjp
def binary_sigmoid(x: jax.Array) -> jax.Array:
    """BinarySigmoid.forward: value = round(sigmoid(x)), grad = sigmoid'(x)."""
    return _binary_sigmoid_forward_value(x)


def _binary_sigmoid_fwd(x):
    return _binary_sigmoid_forward_value(x), x


def _binary_sigmoid_bwd(x, g):
    # Straight-through estimator: gradient of sigmoid (closed form, plain JAX).
    s = jax.nn.sigmoid(x)
    return (g * s * (1.0 - s),)


binary_sigmoid.defvjp(_binary_sigmoid_fwd, _binary_sigmoid_bwd)


if __name__ == "__main__":
    key = jax.random.PRNGKey(0)

    # Small NCHW input consistent with a CIFAR-style conv activation.
    x = jax.random.normal(key, (2, 4, 16, 16), dtype=jnp.float32)

    out = jax.block_until_ready(binary_sigmoid(x))

    # Forward reference: value must equal round(sigmoid(x)).
    ref = jnp.round(jax.nn.sigmoid(x))
    assert out.shape == x.shape and out.dtype == x.dtype
    assert bool(jnp.allclose(out, ref, atol=1e-6)), "forward mismatch vs reference"

    # STE gradient reference: d/dx sum(binary_sigmoid(x)) == sigmoid'(x).
    grad = jax.block_until_ready(jax.grad(lambda t: binary_sigmoid(t).sum())(x))
    s = jax.nn.sigmoid(x)
    assert bool(jnp.allclose(grad, s * (1.0 - s), atol=1e-6)), "STE gradient mismatch"

    # Exercise the non-divisible fallback path (aligned bulk + tiny tail).
    x_odd = jax.random.normal(jax.random.PRNGKey(1), (3, 5, 7), dtype=jnp.float32)
    out_odd = jax.block_until_ready(binary_sigmoid(x_odd))
    ref_odd = jnp.round(jax.nn.sigmoid(x_odd))
    assert bool(jnp.allclose(out_odd, ref_odd, atol=1e-6)), "fallback path mismatch"

    print("KERNEL_OK")
</pallas_src>

<mosaic_0001>
module attributes {stable_mosaic.version = 11 : i64} {
  func.func @_binary_sigmoid_kernel(%arg0: i32, %arg1: memref<8x128xf32, #tpu.memory_space<vmem>>, %arg2: memref<8x128xf32, #tpu.memory_space<vmem>>) attributes {dimension_semantics = [#tpu.dimension_semantics<parallel>], iteration_bounds = array<i64: 2>, scalar_prefetch = 0 : i64, scratch_operands = 0 : i64, tpu.core_type = #tpu.core_type<tc>, window_params = [{transform_indices = @transform_0, window_bounds = array<i64: 8, 128>}, {transform_indices = @transform_1, window_bounds = array<i64: 8, 128>}]} {
    %c0 = arith.constant 0 : index
    %c0_0 = arith.constant 0 : index
    %0 = vector.load %arg1[%c0, %c0_0] : memref<8x128xf32, #tpu.memory_space<vmem>>, vector<8x128xf32>
    %cst = arith.constant 0.000000e+00 : f32
    %1 = vector.broadcast %cst : f32 to vector<8x128xf32>
    %2 = arith.cmpf ogt, %0, %1 : vector<8x128xf32>
    %3 = arith.extui %2 : vector<8x128xi1> to vector<8x128xi32>
    %4 = arith.sitofp %3 : vector<8x128xi32> to vector<8x128xf32>
    %c0_1 = arith.constant 0 : index
    %c0_2 = arith.constant 0 : index
    %5 = vector.load %arg2[%c0_1, %c0_2] : memref<8x128xf32, #tpu.memory_space<vmem>>, vector<8x128xf32>
    tpu.vector_store %arg2[%c0_1, %c0_2], %4 {strides = array<i32>} : memref<8x128xf32, #tpu.memory_space<vmem>>, vector<8x128xf32>,
    return
  }
  func.func @transform_0(%arg0: i32) -> (i32, i32) {
    %c0_i32 = arith.constant 0 : i32
    %c0_i32_0 = arith.constant 0 : i32
    return %arg0, %c0_i32 : i32, i32
  }
  func.func @transform_1(%arg0: i32) -> (i32, i32) {
    %c0_i32 = arith.constant 0 : i32
    %c0_i32_0 = arith.constant 0 : i32
    return %arg0, %c0_i32 : i32, i32
  }
}

</mosaic_0001>

<llo_original>
// kernel: tpu_custom_call.1
$region0: #{tpu_custom_call.1}
  #allocation0 [shape = 'u32[]', space=smem, size = 0x4, offset = 0x4, fixed_abs, tag = 'smem constant byte address 0x4 - core index']
  #allocation1 [shape = 'u32[144,128]{1,0:T(1,128)}', space=vmem, size = 0x12000, scoped, tag = 'internal scratch']
  %s0 = inlined_call_operand.hbm [shape: f32[16,128], index: 0, kind: input, shape index: {}]
  %s1 = inlined_call_operand.hbm [shape: f32[16,128], index: 1, kind: output, shape index: {}]
  %s2 = sld [smem:[#allocation0]]
  $region41: #{tpu_custom_call.1} parent=0
    _
  %s4 = ssub.s32 1, %s2
  %s5 = scalar_select 0, %s4, %s2
  $region1: #{tpu_custom_call.1} parent=0
    #allocation2 [shape = 'u8[8192]{0}', space=vmem, size = 0x2000, scoped, tag = 'input window, operand 0']
    #allocation3 [shape = 's32[2]{0}', space=sflag, size = 0x8, scoped, tag = 'scoped memory for tpu_custom_call.1']
    #allocation4 [shape = 's32[2]{0}', space=sflag, size = 0x8, scoped, tag = 'scoped memory for tpu_custom_call.1']
    #allocation5 [shape = 'u8[8192]{0}', space=vmem, size = 0x2000, scoped, tag = 'output window, operand 0']
    %6 = vsyncpa [#allocation3], 0
    %s7 = scalar_lea.sflag [#allocation3], 1
    %8 = vsyncpa %s7, 0
    %9 = vsyncpa [#allocation4], 0
    %s10 = scalar_lea.sflag [#allocation4], 1
    %11 = vsyncpa %s10, 0
    loop: start=0, step=1, limit=4
    $region2: #{tpu_custom_call.1} parent=1 // loop_pre_header
      _
    $region3: #{tpu_custom_call.1} parent=1 // loop_header
      %s13 = sphi 0, %s17
      %p14 = scmp.ge.s32.totalorder %s13, 4
      %s23 = sphi 0, %s25
      %s26 = sphi 0, %s23
      %s27 = sphi 0, %s26
      %s43 = sphi 0, %s27
      %s49 = sphi 0, %s51
      %s52 = sphi 0, %s49
      %s53 = sphi 0, %s52
      %s69 = sphi 0, %s53
    $region4: #{tpu_custom_call.1} parent=1 // loop_header_branch
      %16 = sbr.rel (%p14) target = $region8
    $region5: #{tpu_custom_call.1} parent=1 // loop_body
      %s18 = ssub.s32 %s13, 1
      %s19 = ssub.s32 %s13, 2
      %s20 = sadd.s32 %s13, 1
      %s21 = ssub.s32 %s13, %s20
      %p22 = scmp.eq.s32.totalorder %s21, 0
      %s24 = sadd.s32 %s23, 1
      %s25 = scalar_select %p22, %s23, %s24
      %p28 = pneg %p22
      %p29 = scmp.eq.s32.totalorder %s13, 1
      %p30 = por %p28, %p29
      %p31 = scmp.ne.s32.totalorder %s23, %s26
      %p32 = scmp.eq.s32.totalorder %s13, 0
      %p33 = por %p31, %p32
      %p34 = scmp.ne.s32.totalorder %s23, %s26
      %p35 = scmp.eq.s32.totalorder %s18, 1
      %p36 = por %p34, %p35
      %p37 = scmp.ne.s32.totalorder %s26, %s27
      %p38 = scmp.eq.s32.totalorder %s18, 0
      %p39 = por %p37, %p38
      %p40 = scmp.ne.s32.totalorder %s26, %s27
      %p41 = scmp.eq.s32.totalorder %s19, 1
      %p42 = por %p40, %p41
      %p44 = scmp.ne.s32.totalorder %s27, %s43
      %p45 = scmp.eq.s32.totalorder %s19, 0
      %p46 = por %p44, %p45
      %s47 = ssub.s32 %s13, %s20
      %p48 = scmp.eq.s32.totalorder %s47, 0
      %s50 = sadd.s32 %s49, 1
      %s51 = scalar_select %p48, %s49, %s50
      %p54 = pneg %p48
      %p55 = scmp.eq.s32.totalorder %s13, 1
      %p56 = por %p54, %p55
      %p57 = scmp.ne.s32.totalorder %s49, %s52
      %p58 = scmp.eq.s32.totalorder %s13, 0
      %p59 = por %p57, %p58
      %p60 = scmp.ne.s32.totalorder %s49, %s52
      %p61 = scmp.eq.s32.totalorder %s18, 1
      %p62 = por %p60, %p61
      %p63 = scmp.ne.s32.totalorder %s52, %s53
      %p64 = scmp.eq.s32.totalorder %s18, 0
      %p65 = por %p63, %p64
      %p66 = scmp.ne.s32.totalorder %s52, %s53
      %p67 = scmp.eq.s32.totalorder %s19, 1
      %p68 = por %p66, %p67
      %p70 = scmp.ne.s32.totalorder %s53, %s69
      %p71 = scmp.eq.s32.totalorder %s19, 0
      %p72 = por %p70, %p71
      %p73 = scmp.le.s32.totalorder 1, %s13
      %p74 = scmp.lt.s32.totalorder %s13, 3
      %p75 = pnand %p73, %p74
      %p76 = pneg %p75
      // Predicated region
      $region9: #{tpu_custom_call.1} parent=5 // pred_check
        _
      $region10: #{tpu_custom_call.1} parent=5 // pred_check_branch
        %78 = sbr.rel (%p75) target = $region12
      $region11: #{tpu_custom_call.1} parent=5 // pred_region
        %s79 = ssub.s32 %s13, 1
      $region12: #{tpu_custom_call.1} parent=5 // pred_fallthru
        _
      %p80 = scmp.lt.s32.totalorder %s13, 2
      // Predicated region
      $region13: #{tpu_custom_call.1} parent=5 // pred_check
        %p81 = pneg %p80
      $region14: #{tpu_custom_call.1} parent=5 // pred_check_branch
        %83 = sbr.rel (%p81) target = $region16
      $region15: #{tpu_custom_call.1} parent=5 // pred_region
        // Predicated region
        $region17: #{tpu_custom_call.1} parent=15 // pred_check
          %p84 = pneg %p33
        $region18: #{tpu_custom_call.1} parent=15 // pred_check_branch
          %86 = sbr.rel (%p84) target = $region20
        $region19: #{tpu_custom_call.1} parent=15 // pred_region
          %s87 = sand.u32 %s23, 1
          %s88 = scalar_lea.sflag [#allocation3], %s87
          %s89 = sand.u32 %s23, 1
          %s90 = smul.addr %s89, 8
          %s91 = scalar_lea.vmem [#allocation2], %s90
          %s93 = ssub.s32 128, 128
          %94 = vsyncadd %s88, %s93
          %s95 = smul.addr %s13, 128
          %s96 = scalar_lea.hbm %s0, %s95
          %s98 = sshll.u32 %s91, 4
          %s99 = int_to_ptr.vmem [resolvable:$true] %s98
          %101 = dma.hbm_to_vmem [thread:$0]  %s96, 128, %s99, %s88
        $region20: #{tpu_custom_call.1} parent=15 // pred_fallthru
          _
      $region16: #{tpu_custom_call.1} parent=5 // pred_fallthru
        _
      %p102 = scmp.le.s32.totalorder 1, %s13
      %p103 = scmp.lt.s32.totalorder %s13, 3
      %p104 = pnand %p102, %p103
      %p105 = pneg %p104
      // Predicated region
      $region21: #{tpu_custom_call.1} parent=5 // pred_check
        _
      $region22: #{tpu_custom_call.1} parent=5 // pred_check_branch
        %107 = sbr.rel (%p104) target = $region24
      $region23: #{tpu_custom_call.1} parent=5 // pred_region
        %s108 = ssub.s32 %s13, 1
        %s109 = sand.u32 %s26, 1
        %s110 = scalar_lea.sflag [#allocation3], %s109
        %s111 = sand.u32 %s26, 1
        %s112 = smul.addr %s111, 8
        %s113 = scalar_lea.vmem [#allocation2], %s112
        // Predicated region
        $region25: #{tpu_custom_call.1} parent=23 // pred_check
          %p114 = pneg %p39
        $region26: #{tpu_custom_call.1} parent=23 // pred_check_branch
          %116 = sbr.rel (%p114) target = $region28
        $region27: #{tpu_custom_call.1} parent=23 // pred_region
          %117 = dma.done %s110, 128
        $region28: #{tpu_custom_call.1} parent=23 // pred_fallthru
          _
        %s118 = sand.u32 %s26, 1
        %s119 = scalar_lea.sflag [#allocation3], %s118
        %s120 = sand.u32 %s26, 1
        %s121 = smul.addr %s120, 8
        %s122 = scalar_lea.vmem [#allocation2], %s121
        %p123 = pneg %p39
        %p124 = pneg %p36
        %p125 = pneg %p65
        %p126 = pneg %p62
        %s127 = sand.u32 %s52, 1
        %s128 = scalar_lea.sflag [#allocation4], %s127
        %s129 = sand.u32 %s52, 1
        %s130 = smul.addr %s129, 8
        %s131 = scalar_lea.vmem [#allocation5], %s130
        %v132 = vld [vmem:[%s113] sm:$0xff]
        %vm133 = vcmp.gt.f32.partialorder %v132, 0.0
        %v134 = vsel %vm133, 1, 0
        %v135 = vcvt.s32.f32 %v134
        %136 = vst [vmem:[%s131] sm:$0xff] %v135
        %s137 = sand.u32 %s52, 1
        %s138 = scalar_lea.sflag [#allocation4], %s137
        %s139 = sand.u32 %s52, 1
        %s140 = smul.addr %s139, 8
        %s141 = scalar_lea.vmem [#allocation5], %s140
        // Predicated region
        $region29: #{tpu_custom_call.1} parent=23 // pred_check
          %p142 = pneg %p62
        $region30: #{tpu_custom_call.1} parent=23 // pred_check_branch
          %144 = sbr.rel (%p142) target = $region32
        $region31: #{tpu_custom_call.1} parent=23 // pred_region
          %s146 = ssub.s32 128, 128
          %147 = vsyncadd %s138, %s146
          %s148 = smul.addr %s18, 128
          %s149 = scalar_lea.hbm %s1, %s148
          %s151 = sshll.u32 %s141, 4
          %s152 = int_to_ptr.vmem [resolvable:$true] %s151
          %154 = dma.vmem_to_hbm [thread:$0]  %s152, 128, %s149, %s138
        $region32: #{tpu_custom_call.1} parent=23 // pred_fallthru
          _
      $region24: #{tpu_custom_call.1} parent=5 // pred_fallthru
        _
      %p155 = scmp.le.s32.totalorder 2, %s13
      // Predicated region
      $region33: #{tpu_custom_call.1} parent=5 // pred_check
        %p156 = pneg %p155
      $region34: #{tpu_custom_call.1} parent=5 // pred_check_branch
        %158 = sbr.rel (%p156) target = $region36
      $region35: #{tpu_custom_call.1} parent=5 // pred_region
        %s159 = ssub.s32 %s13, 2
        // Predicated region
        $region37: #{tpu_custom_call.1} parent=35 // pred_check
          %p160 = pneg %p68
        $region38: #{tpu_custom_call.1} parent=35 // pred_check_branch
          %162 = sbr.rel (%p160) target = $region40
        $region39: #{tpu_custom_call.1} parent=35 // pred_region
          %s163 = sand.u32 %s53, 1
          %s164 = scalar_lea.sflag [#allocation4], %s163
          %s165 = sand.u32 %s53, 1
          %s166 = smul.addr %s165, 8
          %s167 = scalar_lea.vmem [#allocation5], %s166
          %168 = dma.done %s164, 128
        $region40: #{tpu_custom_call.1} parent=35 // pred_fallthru
          _
      $region36: #{tpu_custom_call.1} parent=5 // pred_fallthru
        _
    $region6: #{tpu_custom_call.1} parent=1 // loop_footer
      %s17 = sadd.s32 1, %s13
    $region7: #{tpu_custom_call.1} parent=1 // loop_footer_branch
      %12 = sbr.rel target = $region3
    $region8: #{tpu_custom_call.1} parent=1 // loop_exit
      _
    %169 = vsyncpa [#allocation3], 1
    %s170 = scalar_lea.sflag [#allocation3], 1
    %171 = vsyncpa %s170, 1
    %172 = vsyncpa [#allocation4], 1
    %s173 = scalar_lea.sflag [#allocation4], 1
    %174 = vsyncpa %s173, 1

</llo_original>
